<compile_context>
chip_gen: v5e
topology: v5e:2x2
jax: 0.10.0
libtpu: 0.0.40
codegen_flags: <defaults>
</compile_context>

<pallas_src>
import functools

import jax
import jax.numpy as jnp
from jax.experimental import pallas as pl
from jax.experimental.pallas import tpu as pltpu


def _round_up(x, m):
    return ((x + m - 1) // m) * m


def _node_tiling(n):
    """(padded_n, tile_m, tile_k) for the node axis, shared by every call."""
    if n <= 1024:
        np_ = _round_up(n, 16)          # single tile covering the whole axis
        return np_, np_, np_
    tm = 512
    tk = 2048 if n > 2048 else 1024
    np_ = _round_up(n, max(tm, tk))     # divisible by both tm and tk
    return np_, tm, tk


# --------------------------------------------------------------------------
# Pallas kernel: tiled  o = a @ b [+ bias] [+ ReLU]
# --------------------------------------------------------------------------
def _mm_kernel(*refs, has_bias, apply_relu, use_acc):
    """Grid = (row tiles, K tiles).  Accumulate over K; epilogue on last K.

    refs layout:
      a_ref [tm, tk], b_ref [tk, F], (bias_ref [1, F] if has_bias),
      o_ref [tm, F], (acc_ref [tm, F] f32 scratch if use_acc)
    When the output dtype is f32 (use_acc=False) we accumulate directly into
    the resident output tile and skip the scratch buffer.
    """
    if has_bias:
        a_ref, b_ref, bias_ref, o_ref = refs[:4]
        rest = refs[4:]
    else:
        a_ref, b_ref, o_ref = refs[:3]
        bias_ref = None
        rest = refs[3:]
    acc_ref = rest[0] if use_acc else o_ref

    k = pl.program_id(1)

    @pl.when(k == 0)
    def _():
        acc_ref[...] = jnp.zeros_like(acc_ref)

    acc_ref[...] += jnp.dot(a_ref[...], b_ref[...],
                            preferred_element_type=jnp.float32)

    if has_bias or apply_relu or use_acc:
        @pl.when(k == pl.num_programs(1) - 1)
        def _():
            out = acc_ref[...]
            if has_bias:
                out = out + bias_ref[...]           # f32 epilogue
            if apply_relu:
                out = jnp.maximum(out, 0.0)
            o_ref[...] = out.astype(o_ref.dtype)


def matmul_bias(a, b, bias=None, *, apply_relu=False, out_dtype=jnp.float32,
                tile_m=512, tile_k=2048,
                vmem_limit_bytes=32 * 1024 * 1024):
    """o = a @ b (+ bias) (+ ReLU) as one tiled pallas_call.

    a: [M, K], b: [K, F], bias: [F] or None.  F (feature width) stays whole —
    the caller is expected to have padded it to a multiple of 128.  The
    returned array keeps the padded row count (caller slices at the end).
    Padding here is a no-op when the caller already aligned M and K.
    """
    M, K = a.shape
    Kb, F = b.shape
    assert K == Kb

    tm = M if M <= tile_m else tile_m
    tk = K if K <= tile_k else tile_k
    Mp = _round_up(M, tm)
    Kp = _round_up(K, tk)
    if Mp != M or Kp != K:
        a = jnp.pad(a, ((0, Mp - M), (0, Kp - K)))
    if Kp != K:
        b = jnp.pad(b, ((0, Kp - K), (0, 0)))

    has_bias = bias is not None
    use_acc = jnp.dtype(out_dtype) != jnp.dtype(jnp.float32)

    in_specs = [
        pl.BlockSpec((tm, tk), lambda i, k: (i, k)),   # a tile
        pl.BlockSpec((tk, F), lambda i, k: (k, 0)),    # b tile (full lane width)
    ]
    args = [a, b]
    if has_bias:
        in_specs.append(pl.BlockSpec((1, F), lambda i, k: (0, 0)))
        args.append(bias.astype(jnp.float32).reshape(1, F))

    scratch = [pltpu.VMEM((tm, F), jnp.float32)] if use_acc else []

    out = pl.pallas_call(
        functools.partial(_mm_kernel, has_bias=has_bias,
                          apply_relu=apply_relu, use_acc=use_acc),
        out_shape=jax.ShapeDtypeStruct((Mp, F), out_dtype),
        grid_spec=pltpu.PrefetchScalarGridSpec(
            num_scalar_prefetch=0,
            grid=(Mp // tm, Kp // tk),
            in_specs=in_specs,
            out_specs=pl.BlockSpec((tm, F), lambda i, k: (i, 0)),
            scratch_shapes=scratch,
        ),
        compiler_params=pltpu.CompilerParams(
            dimension_semantics=("parallel", "arbitrary"),
            vmem_limit_bytes=vmem_limit_bytes),
    )(*args)
    return out   # [Mp, F]; caller slices rows / lanes


# --------------------------------------------------------------------------
# Graph preprocessing (plain JAX glue): dense symmetric-normalized adjacency
# --------------------------------------------------------------------------
def gcn_norm_dense(edge_index, num_nodes, edge_weight=None):
    """A_norm[i, j] = deg(i)^-1/2 * A_hat[i, j] * deg(j)^-1/2,
    A_hat[dst, src] = edge_weight (summed over duplicate edges) + remaining
    self loops with weight 1 (PyG gcn_norm semantics)."""
    src, dst = edge_index[0], edge_index[1]
    if edge_weight is None:
        edge_weight = jnp.ones(src.shape[0], jnp.float32)
    adj = jnp.zeros((num_nodes, num_nodes), jnp.float32)
    adj = adj.at[dst, src].add(edge_weight.astype(jnp.float32))
    diag = jnp.diagonal(adj)
    adj = adj + jnp.diag(jnp.where(diag == 0.0, 1.0, 0.0))  # remaining self loops
    deg = jnp.sum(adj, axis=1)
    dis = jnp.where(deg > 0.0, jax.lax.rsqrt(deg), 0.0)
    return adj * dis[:, None] * dis[None, :]


# --------------------------------------------------------------------------
# GCNEncoder parameters + forward
# --------------------------------------------------------------------------
def _glorot(key, shape):
    fan_in, fan_out = shape[0], shape[1]
    limit = (6.0 / (fan_in + fan_out)) ** 0.5
    return jax.random.uniform(key, shape, jnp.float32, -limit, limit)


def init_gcn_encoder_params(key, in_channels, hidden_channels, out_channels):
    ks = jax.random.split(key, 3)
    return {
        "W1": _glorot(ks[0], (in_channels, hidden_channels)),
        "b1": jnp.zeros((hidden_channels,), jnp.float32),
        "Wmu": _glorot(ks[1], (hidden_channels, out_channels)),
        "bmu": jnp.zeros((out_channels,), jnp.float32),
        "Wlv": _glorot(ks[2], (hidden_channels, out_channels)),
        "blv": jnp.zeros((out_channels,), jnp.float32),
    }


def gcn_encoder_forward(params, x, edge_index, edge_weight=None,
                        compute_dtype=jnp.bfloat16):
    """mu, logvar = GCNEncoder(x, edge_index)  (eval mode).

    All matmul operands run in `compute_dtype` (bf16 by default) with f32
    accumulation; mu/logvar come back in f32.
    """
    N, Cin = x.shape
    H = params["W1"].shape[1]
    C = params["Wmu"].shape[1]

    # Lane-padded feature widths (multiples of 128 -> unmasked stores, full
    # MXU columns) and node-axis padding/tiling shared by every kernel call.
    Hp = _round_up(H, 128)
    Fp = _round_up(2 * C, 128)
    Cin_p = _round_up(Cin, 16)
    Np, tm, tk = _node_tiling(N)

    cdt = compute_dtype

    # Normalized adjacency: built, padded and cast exactly once; shared by
    # both aggregation calls.  Padded rows/cols are zero, so they never
    # contaminate real nodes.
    adj = gcn_norm_dense(edge_index, N, edge_weight)
    adj = jnp.pad(adj, ((0, Np - N), (0, Np - N))).astype(cdt)

    x_p = jnp.pad(x.astype(jnp.float32),
                  ((0, Np - N), (0, Cin_p - Cin))).astype(cdt)
    W1_p = jnp.pad(params["W1"], ((0, Cin_p - Cin), (0, Hp - H))).astype(cdt)
    b1_p = jnp.pad(params["b1"], (0, Hp - H))

    # mu / logvar fused: [Wmu | Wlv] on the lane axis -> one projection and
    # one adjacency aggregation for both heads.
    w_ml = jnp.concatenate([params["Wmu"], params["Wlv"]], axis=1)
    w_ml_p = jnp.pad(w_ml, ((0, Hp - H), (0, Fp - 2 * C))).astype(cdt)
    b_ml_p = jnp.pad(jnp.concatenate([params["bmu"], params["blv"]]),
                     (0, Fp - 2 * C))

    # gcn1 + ReLU:  h = relu(A_norm @ (x @ W1) + b1)
    xw1 = matmul_bias(x_p, W1_p, out_dtype=cdt, tile_m=tm)
    h = matmul_bias(adj, xw1, b1_p, apply_relu=True, out_dtype=cdt,
                    tile_m=tm, tile_k=tk)
    # TODO(synk): training-mode dropout (p=0.5) omitted; F.dropout is the
    # identity in eval mode (would need pltpu.prng_* inside the kernel).

    # gcn_mu / gcn_logvar: one projection + one aggregation, f32 output.
    hw = matmul_bias(h, w_ml_p, out_dtype=cdt, tile_m=tm)
    out = matmul_bias(adj, hw, b_ml_p, out_dtype=jnp.float32,
                      tile_m=tm, tile_k=tk)

    out = out[:N]
    return out[:, :C], out[:, C:2 * C]


def _reference_forward(params, x, edge_index, edge_weight=None):
    """Pure-JAX reference (high-precision matmuls) for correctness checking."""
    adj = gcn_norm_dense(edge_index, x.shape[0], edge_weight)
    hp = jax.lax.Precision.HIGHEST
    h = jnp.maximum(
        jnp.dot(adj, jnp.dot(x, params["W1"], precision=hp), precision=hp)
        + params["b1"], 0.0)
    mu = (jnp.dot(adj, jnp.dot(h, params["Wmu"], precision=hp), precision=hp)
          + params["bmu"])
    lv = (jnp.dot(adj, jnp.dot(h, params["Wlv"], precision=hp), precision=hp)
          + params["blv"])
    return mu, lv


if __name__ == "__main__":
    key = jax.random.PRNGKey(0)
    k_x, k_e, k_p = jax.random.split(key, 3)

    num_nodes = 16
    in_channels = 8
    hidden_channels = 32
    out_channels = 8
    num_edges = 40

    x = jax.random.normal(k_x, (num_nodes, in_channels), jnp.float32)
    edge_index = jax.random.randint(k_e, (2, num_edges), 0, num_nodes,
                                    dtype=jnp.int32)

    params = init_gcn_encoder_params(k_p, in_channels, hidden_channels,
                                     out_channels)

    fwd_bf16 = jax.jit(functools.partial(gcn_encoder_forward,
                                         compute_dtype=jnp.bfloat16))
    fwd_f32 = jax.jit(functools.partial(gcn_encoder_forward,
                                        compute_dtype=jnp.float32))

    mu, logvar = fwd_bf16(params, x, edge_index)
    jax.block_until_ready((mu, logvar))

    assert mu.shape == (num_nodes, out_channels)
    assert logvar.shape == (num_nodes, out_channels)
    assert bool(jnp.all(jnp.isfinite(mu)))
    assert bool(jnp.all(jnp.isfinite(logvar)))

    mu_ref, lv_ref = _reference_forward(params, x, edge_index)

    # bf16 operands / f32 accumulation: loose tolerance.
    assert bool(jnp.allclose(mu, mu_ref, rtol=3e-2, atol=3e-2))
    assert bool(jnp.allclose(logvar, lv_ref, rtol=3e-2, atol=3e-2))

    # full-f32 path: tight tolerance.
    mu32, lv32 = fwd_f32(params, x, edge_index)
    jax.block_until_ready((mu32, lv32))
    assert bool(jnp.allclose(mu32, mu_ref, rtol=5e-3, atol=5e-3))
    assert bool(jnp.allclose(lv32, lv_ref, rtol=5e-3, atol=5e-3))

    print("KERNEL_OK")
</pallas_src>

<mosaic_0001>
module attributes {stable_mosaic.version = 11 : i64} {
  func.func @_mm_kernel(%arg0: i32, %arg1: i32, %arg2: memref<16x16xbf16, #tpu.memory_space<vmem>>, %arg3: memref<16x128xbf16, #tpu.memory_space<vmem>>, %arg4: memref<16x128xbf16, #tpu.memory_space<vmem>>, %arg5: memref<16x128xf32, #tpu.memory_space<vmem>>) attributes {dimension_semantics = [#tpu.dimension_semantics<parallel>, #tpu.dimension_semantics<arbitrary>], iteration_bounds = array<i64: 1, 1>, scalar_prefetch = 0 : i64, scratch_operands = 1 : i64, tpu.core_type = #tpu.core_type<tc>, window_params = [{transform_indices = @transform_0, window_bounds = array<i64: 16, 16>}, {transform_indices = @transform_1, window_bounds = array<i64: 16, 128>}, {transform_indices = @transform_2, window_bounds = array<i64: 16, 128>}]} {
    %c0_i32 = arith.constant 0 : i32
    %0 = arith.cmpi eq, %arg1, %c0_i32 : i32
    %1 = arith.extui %0 : i1 to i32
    %c0_i32_0 = arith.constant 0 : i32
    %2 = arith.cmpi ne, %1, %c0_i32_0 : i32
    scf.if %2 {
      %cst_10 = arith.constant 0.000000e+00 : f32
      %12 = vector.broadcast %cst_10 : f32 to vector<16x128xf32>
      %c0_11 = arith.constant 0 : index
      %c0_12 = arith.constant 0 : index
      %13 = vector.load %arg5[%c0_11, %c0_12] : memref<16x128xf32, #tpu.memory_space<vmem>>, vector<16x128xf32>
      tpu.vector_store %arg5[%c0_11, %c0_12], %12 {strides = array<i32>} : memref<16x128xf32, #tpu.memory_space<vmem>>, vector<16x128xf32>,
    } else {
    }
    %c0 = arith.constant 0 : index
    %c0_1 = arith.constant 0 : index
    %3 = vector.load %arg5[%c0, %c0_1] : memref<16x128xf32, #tpu.memory_space<vmem>>, vector<16x128xf32>
    %c0_2 = arith.constant 0 : index
    %c0_3 = arith.constant 0 : index
    %4 = vector.load %arg2[%c0_2, %c0_3] : memref<16x16xbf16, #tpu.memory_space<vmem>>, vector<16x16xbf16>
    %c0_4 = arith.constant 0 : index
    %c0_5 = arith.constant 0 : index
    %5 = vector.load %arg3[%c0_4, %c0_5] : memref<16x128xbf16, #tpu.memory_space<vmem>>, vector<16x128xbf16>
    %cst = arith.constant dense<0.000000e+00> : vector<16x128xf32>
    %6 = tpu.matmul %4, %5, %cst {dimension_numbers = #tpu.dot_dimension_numbers<[1], [0], [0], [1], [0, 0, 1, 1], [], []>} : vector<16x16xbf16>, vector<16x128xbf16>, vector<16x128xf32> -> vector<16x128xf32>
    %7 = arith.addf %3, %6 : vector<16x128xf32>
    %c0_6 = arith.constant 0 : index
    %c0_7 = arith.constant 0 : index
    %8 = vector.load %arg5[%c0_6, %c0_7] : memref<16x128xf32, #tpu.memory_space<vmem>>, vector<16x128xf32>
    tpu.vector_store %arg5[%c0_6, %c0_7], %7 {strides = array<i32>} : memref<16x128xf32, #tpu.memory_space<vmem>>, vector<16x128xf32>,
    %c0_i32_8 = arith.constant 0 : i32
    %9 = arith.cmpi eq, %arg1, %c0_i32_8 : i32
    %10 = arith.extui %9 : i1 to i32
    %c0_i32_9 = arith.constant 0 : i32
    %11 = arith.cmpi ne, %10, %c0_i32_9 : i32
    scf.if %11 {
      %c0_10 = arith.constant 0 : index
      %c0_11 = arith.constant 0 : index
      %12 = vector.load %arg5[%c0_10, %c0_11] : memref<16x128xf32, #tpu.memory_space<vmem>>, vector<16x128xf32>
      %13 = arith.truncf %12 : vector<16x128xf32> to vector<16x128xbf16>
      %c0_12 = arith.constant 0 : index
      %c0_13 = arith.constant 0 : index
      %14 = vector.load %arg4[%c0_12, %c0_13] : memref<16x128xbf16, #tpu.memory_space<vmem>>, vector<16x128xbf16>
      tpu.vector_store %arg4[%c0_12, %c0_13], %13 {strides = array<i32>} : memref<16x128xbf16, #tpu.memory_space<vmem>>, vector<16x128xbf16>,
    } else {
    }
    return
  }
  func.func @transform_0(%arg0: i32, %arg1: i32) -> (i32, i32) {
    %c0_i32 = arith.constant 0 : i32
    return %arg0, %arg1 : i32, i32
  }
  func.func @transform_1(%arg0: i32, %arg1: i32) -> (i32, i32) {
    %c0_i32 = arith.constant 0 : i32
    %c0_i32_0 = arith.constant 0 : i32
    return %arg1, %c0_i32 : i32, i32
  }
  func.func @transform_2(%arg0: i32, %arg1: i32) -> (i32, i32) {
    %c0_i32 = arith.constant 0 : i32
    %c0_i32_0 = arith.constant 0 : i32
    return %arg0, %c0_i32 : i32, i32
  }
}

module attributes {stable_mosaic.version = 11 : i64} {
  func.func @_mm_kernel(%arg0: i32, %arg1: i32, %arg2: memref<16x16xbf16, #tpu.memory_space<vmem>>, %arg3: memref<16x128xbf16, #tpu.memory_space<vmem>>, %arg4: memref<1x128xf32, #tpu.memory_space<vmem>>, %arg5: memref<16x128xbf16, #tpu.memory_space<vmem>>, %arg6: memref<16x128xf32, #tpu.memory_space<vmem>>) attributes {dimension_semantics = [#tpu.dimension_semantics<parallel>, #tpu.dimension_semantics<arbitrary>], iteration_bounds = array<i64: 1, 1>, scalar_prefetch = 0 : i64, scratch_operands = 1 : i64, tpu.core_type = #tpu.core_type<tc>, window_params = [{transform_indices = @transform_0, window_bounds = array<i64: 16, 16>}, {transform_indices = @transform_1, window_bounds = array<i64: 16, 128>}, {pipeline_mode = #tpu.pipeline_mode<synchronous>, transform_indices = @transform_2, window_bounds = array<i64: 1, 128>}, {transform_indices = @transform_3, window_bounds = array<i64: 16, 128>}]} {
    %c0_i32 = arith.constant 0 : i32
    %0 = arith.cmpi eq, %arg1, %c0_i32 : i32
    %1 = arith.extui %0 : i1 to i32
    %c0_i32_0 = arith.constant 0 : i32
    %2 = arith.cmpi ne, %1, %c0_i32_0 : i32
    scf.if %2 {
      %cst_10 = arith.constant 0.000000e+00 : f32
      %12 = vector.broadcast %cst_10 : f32 to vector<16x128xf32>
      %c0_11 = arith.constant 0 : index
      %c0_12 = arith.constant 0 : index
      %13 = vector.load %arg6[%c0_11, %c0_12] : memref<16x128xf32, #tpu.memory_space<vmem>>, vector<16x128xf32>
      tpu.vector_store %arg6[%c0_11, %c0_12], %12 {strides = array<i32>} : memref<16x128xf32, #tpu.memory_space<vmem>>, vector<16x128xf32>,
    } else {
    }
    %c0 = arith.constant 0 : index
    %c0_1 = arith.constant 0 : index
    %3 = vector.load %arg6[%c0, %c0_1] : memref<16x128xf32, #tpu.memory_space<vmem>>, vector<16x128xf32>
    %c0_2 = arith.constant 0 : index
    %c0_3 = arith.constant 0 : index
    %4 = vector.load %arg2[%c0_2, %c0_3] : memref<16x16xbf16, #tpu.memory_space<vmem>>, vector<16x16xbf16>
    %c0_4 = arith.constant 0 : index
    %c0_5 = arith.constant 0 : index
    %5 = vector.load %arg3[%c0_4, %c0_5] : memref<16x128xbf16, #tpu.memory_space<vmem>>, vector<16x128xbf16>
    %cst = arith.constant dense<0.000000e+00> : vector<16x128xf32>
    %6 = tpu.matmul %4, %5, %cst {dimension_numbers = #tpu.dot_dimension_numbers<[1], [0], [0], [1], [0, 0, 1, 1], [], []>} : vector<16x16xbf16>, vector<16x128xbf16>, vector<16x128xf32> -> vector<16x128xf32>
    %7 = arith.addf %3, %6 : vector<16x128xf32>
    %c0_6 = arith.constant 0 : index
    %c0_7 = arith.constant 0 : index
    %8 = vector.load %arg6[%c0_6, %c0_7] : memref<16x128xf32, #tpu.memory_space<vmem>>, vector<16x128xf32>
    tpu.vector_store %arg6[%c0_6, %c0_7], %7 {strides = array<i32>} : memref<16x128xf32, #tpu.memory_space<vmem>>, vector<16x128xf32>,
    %c0_i32_8 = arith.constant 0 : i32
    %9 = arith.cmpi eq, %arg1, %c0_i32_8 : i32
    %10 = arith.extui %9 : i1 to i32
    %c0_i32_9 = arith.constant 0 : i32
    %11 = arith.cmpi ne, %10, %c0_i32_9 : i32
    scf.if %11 {
      %c0_10 = arith.constant 0 : index
      %c0_11 = arith.constant 0 : index
      %12 = vector.load %arg6[%c0_10, %c0_11] : memref<16x128xf32, #tpu.memory_space<vmem>>, vector<16x128xf32>
      %c0_12 = arith.constant 0 : index
      %c0_13 = arith.constant 0 : index
      %13 = vector.load %arg4[%c0_12, %c0_13] : memref<1x128xf32, #tpu.memory_space<vmem>>, vector<1x128xf32>
      %14 = vector.broadcast %13 : vector<1x128xf32> to vector<16x128xf32>
      %15 = arith.addf %12, %14 : vector<16x128xf32>
      %cst_14 = arith.constant 0.000000e+00 : f32
      %16 = vector.broadcast %cst_14 : f32 to vector<16x128xf32>
      %17 = arith.maximumf %15, %16 : vector<16x128xf32>
      %18 = arith.truncf %17 : vector<16x128xf32> to vector<16x128xbf16>
      %c0_15 = arith.constant 0 : index
      %c0_16 = arith.constant 0 : index
      %19 = vector.load %arg5[%c0_15, %c0_16] : memref<16x128xbf16, #tpu.memory_space<vmem>>, vector<16x128xbf16>
      tpu.vector_store %arg5[%c0_15, %c0_16], %18 {strides = array<i32>} : memref<16x128xbf16, #tpu.memory_space<vmem>>, vector<16x128xbf16>,
    } else {
    }
    return
  }
  func.func @transform_0(%arg0: i32, %arg1: i32) -> (i32, i32) {
    %c0_i32 = arith.constant 0 : i32
    return %arg0, %arg1 : i32, i32
  }
  func.func @transform_1(%arg0: i32, %arg1: i32) -> (i32, i32) {
    %c0_i32 = arith.constant 0 : i32
    %c0_i32_0 = arith.constant 0 : i32
    return %arg1, %c0_i32 : i32, i32
  }
  func.func @transform_2(%arg0: i32, %arg1: i32) -> (i32, i32) {
    %c0_i32 = arith.constant 0 : i32
    %c0_i32_0 = arith.constant 0 : i32
    %c0_i32_1 = arith.constant 0 : i32
    return %c0_i32, %c0_i32_0 : i32, i32
  }
  func.func @transform_3(%arg0: i32, %arg1: i32) -> (i32, i32) {
    %c0_i32 = arith.constant 0 : i32
    %c0_i32_0 = arith.constant 0 : i32
    return %arg0, %c0_i32 : i32, i32
  }
}

module attributes {stable_mosaic.version = 11 : i64} {
  func.func @_mm_kernel(%arg0: i32, %arg1: i32, %arg2: memref<16x128xbf16, #tpu.memory_space<vmem>>, %arg3: memref<128x128xbf16, #tpu.memory_space<vmem>>, %arg4: memref<16x128xbf16, #tpu.memory_space<vmem>>, %arg5: memref<16x128xf32, #tpu.memory_space<vmem>>) attributes {dimension_semantics = [#tpu.dimension_semantics<parallel>, #tpu.dimension_semantics<arbitrary>], iteration_bounds = array<i64: 1, 1>, scalar_prefetch = 0 : i64, scratch_operands = 1 : i64, tpu.core_type = #tpu.core_type<tc>, window_params = [{transform_indices = @transform_0, window_bounds = array<i64: 16, 128>}, {transform_indices = @transform_1, window_bounds = array<i64: 128, 128>}, {transform_indices = @transform_2, window_bounds = array<i64: 16, 128>}]} {
    %c0_i32 = arith.constant 0 : i32
    %0 = arith.cmpi eq, %arg1, %c0_i32 : i32
    %1 = arith.extui %0 : i1 to i32
    %c0_i32_0 = arith.constant 0 : i32
    %2 = arith.cmpi ne, %1, %c0_i32_0 : i32
    scf.if %2 {
      %cst_10 = arith.constant 0.000000e+00 : f32
      %12 = vector.broadcast %cst_10 : f32 to vector<16x128xf32>
      %c0_11 = arith.constant 0 : index
      %c0_12 = arith.constant 0 : index
      %13 = vector.load %arg5[%c0_11, %c0_12] : memref<16x128xf32, #tpu.memory_space<vmem>>, vector<16x128xf32>
      tpu.vector_store %arg5[%c0_11, %c0_12], %12 {strides = array<i32>} : memref<16x128xf32, #tpu.memory_space<vmem>>, vector<16x128xf32>,
    } else {
    }
    %c0 = arith.constant 0 : index
    %c0_1 = arith.constant 0 : index
    %3 = vector.load %arg5[%c0, %c0_1] : memref<16x128xf32, #tpu.memory_space<vmem>>, vector<16x128xf32>
    %c0_2 = arith.constant 0 : index
    %c0_3 = arith.constant 0 : index
    %4 = vector.load %arg2[%c0_2, %c0_3] : memref<16x128xbf16, #tpu.memory_space<vmem>>, vector<16x128xbf16>
    %c0_4 = arith.constant 0 : index
    %c0_5 = arith.constant 0 : index
    %5 = vector.load %arg3[%c0_4, %c0_5] : memref<128x128xbf16, #tpu.memory_space<vmem>>, vector<128x128xbf16>
    %cst = arith.constant dense<0.000000e+00> : vector<16x128xf32>
    %6 = tpu.matmul %4, %5, %cst {dimension_numbers = #tpu.dot_dimension_numbers<[1], [0], [0], [1], [0, 0, 1, 1], [], []>} : vector<16x128xbf16>, vector<128x128xbf16>, vector<16x128xf32> -> vector<16x128xf32>
    %7 = arith.addf %3, %6 : vector<16x128xf32>
    %c0_6 = arith.constant 0 : index
    %c0_7 = arith.constant 0 : index
    %8 = vector.load %arg5[%c0_6, %c0_7] : memref<16x128xf32, #tpu.memory_space<vmem>>, vector<16x128xf32>
    tpu.vector_store %arg5[%c0_6, %c0_7], %7 {strides = array<i32>} : memref<16x128xf32, #tpu.memory_space<vmem>>, vector<16x128xf32>,
    %c0_i32_8 = arith.constant 0 : i32
    %9 = arith.cmpi eq, %arg1, %c0_i32_8 : i32
    %10 = arith.extui %9 : i1 to i32
    %c0_i32_9 = arith.constant 0 : i32
    %11 = arith.cmpi ne, %10, %c0_i32_9 : i32
    scf.if %11 {
      %c0_10 = arith.constant 0 : index
      %c0_11 = arith.constant 0 : index
      %12 = vector.load %arg5[%c0_10, %c0_11] : memref<16x128xf32, #tpu.memory_space<vmem>>, vector<16x128xf32>
      %13 = arith.truncf %12 : vector<16x128xf32> to vector<16x128xbf16>
      %c0_12 = arith.constant 0 : index
      %c0_13 = arith.constant 0 : index
      %14 = vector.load %arg4[%c0_12, %c0_13] : memref<16x128xbf16, #tpu.memory_space<vmem>>, vector<16x128xbf16>
      tpu.vector_store %arg4[%c0_12, %c0_13], %13 {strides = array<i32>} : memref<16x128xbf16, #tpu.memory_space<vmem>>, vector<16x128xbf16>,
    } else {
    }
    return
  }
  func.func @transform_0(%arg0: i32, %arg1: i32) -> (i32, i32) {
    %c0_i32 = arith.constant 0 : i32
    return %arg0, %arg1 : i32, i32
  }
  func.func @transform_1(%arg0: i32, %arg1: i32) -> (i32, i32) {
    %c0_i32 = arith.constant 0 : i32
    %c0_i32_0 = arith.constant 0 : i32
    return %arg1, %c0_i32 : i32, i32
  }
  func.func @transform_2(%arg0: i32, %arg1: i32) -> (i32, i32) {
    %c0_i32 = arith.constant 0 : i32
    %c0_i32_0 = arith.constant 0 : i32
    return %arg0, %c0_i32 : i32, i32
  }
}

module attributes {stable_mosaic.version = 11 : i64} {
  func.func @_mm_kernel(%arg0: i32, %arg1: i32, %arg2: memref<16x16xbf16, #tpu.memory_space<vmem>>, %arg3: memref<16x128xbf16, #tpu.memory_space<vmem>>, %arg4: memref<1x128xf32, #tpu.memory_space<vmem>>, %arg5: memref<16x128xf32, #tpu.memory_space<vmem>>) attributes {dimension_semantics = [#tpu.dimension_semantics<parallel>, #tpu.dimension_semantics<arbitrary>], iteration_bounds = array<i64: 1, 1>, scalar_prefetch = 0 : i64, scratch_operands = 0 : i64, tpu.core_type = #tpu.core_type<tc>, window_params = [{transform_indices = @transform_0, window_bounds = array<i64: 16, 16>}, {transform_indices = @transform_1, window_bounds = array<i64: 16, 128>}, {pipeline_mode = #tpu.pipeline_mode<synchronous>, transform_indices = @transform_2, window_bounds = array<i64: 1, 128>}, {transform_indices = @transform_3, window_bounds = array<i64: 16, 128>}]} {
    %c0_i32 = arith.constant 0 : i32
    %0 = arith.cmpi eq, %arg1, %c0_i32 : i32
    %1 = arith.extui %0 : i1 to i32
    %c0_i32_0 = arith.constant 0 : i32
    %2 = arith.cmpi ne, %1, %c0_i32_0 : i32
    scf.if %2 {
      %cst_10 = arith.constant 0.000000e+00 : f32
      %12 = vector.broadcast %cst_10 : f32 to vector<16x128xf32>
      %c0_11 = arith.constant 0 : index
      %c0_12 = arith.constant 0 : index
      %13 = vector.load %arg5[%c0_11, %c0_12] : memref<16x128xf32, #tpu.memory_space<vmem>>, vector<16x128xf32>
      tpu.vector_store %arg5[%c0_11, %c0_12], %12 {strides = array<i32>} : memref<16x128xf32, #tpu.memory_space<vmem>>, vector<16x128xf32>,
    } else {
    }
    %c0 = arith.constant 0 : index
    %c0_1 = arith.constant 0 : index
    %3 = vector.load %arg5[%c0, %c0_1] : memref<16x128xf32, #tpu.memory_space<vmem>>, vector<16x128xf32>
    %c0_2 = arith.constant 0 : index
    %c0_3 = arith.constant 0 : index
    %4 = vector.load %arg2[%c0_2, %c0_3] : memref<16x16xbf16, #tpu.memory_space<vmem>>, vector<16x16xbf16>
    %c0_4 = arith.constant 0 : index
    %c0_5 = arith.constant 0 : index
    %5 = vector.load %arg3[%c0_4, %c0_5] : memref<16x128xbf16, #tpu.memory_space<vmem>>, vector<16x128xbf16>
    %cst = arith.constant dense<0.000000e+00> : vector<16x128xf32>
    %6 = tpu.matmul %4, %5, %cst {dimension_numbers = #tpu.dot_dimension_numbers<[1], [0], [0], [1], [0, 0, 1, 1], [], []>} : vector<16x16xbf16>, vector<16x128xbf16>, vector<16x128xf32> -> vector<16x128xf32>
    %7 = arith.addf %3, %6 : vector<16x128xf32>
    %c0_6 = arith.constant 0 : index
    %c0_7 = arith.constant 0 : index
    %8 = vector.load %arg5[%c0_6, %c0_7] : memref<16x128xf32, #tpu.memory_space<vmem>>, vector<16x128xf32>
    tpu.vector_store %arg5[%c0_6, %c0_7], %7 {strides = array<i32>} : memref<16x128xf32, #tpu.memory_space<vmem>>, vector<16x128xf32>,
    %c0_i32_8 = arith.constant 0 : i32
    %9 = arith.cmpi eq, %arg1, %c0_i32_8 : i32
    %10 = arith.extui %9 : i1 to i32
    %c0_i32_9 = arith.constant 0 : i32
    %11 = arith.cmpi ne, %10, %c0_i32_9 : i32
    scf.if %11 {
      %c0_10 = arith.constant 0 : index
      %c0_11 = arith.constant 0 : index
      %12 = vector.load %arg5[%c0_10, %c0_11] : memref<16x128xf32, #tpu.memory_space<vmem>>, vector<16x128xf32>
      %c0_12 = arith.constant 0 : index
      %c0_13 = arith.constant 0 : index
      %13 = vector.load %arg4[%c0_12, %c0_13] : memref<1x128xf32, #tpu.memory_space<vmem>>, vector<1x128xf32>
      %14 = vector.broadcast %13 : vector<1x128xf32> to vector<16x128xf32>
      %15 = arith.addf %12, %14 : vector<16x128xf32>
      %c0_14 = arith.constant 0 : index
      %c0_15 = arith.constant 0 : index
      %16 = vector.load %arg5[%c0_14, %c0_15] : memref<16x128xf32, #tpu.memory_space<vmem>>, vector<16x128xf32>
      tpu.vector_store %arg5[%c0_14, %c0_15], %15 {strides = array<i32>} : memref<16x128xf32, #tpu.memory_space<vmem>>, vector<16x128xf32>,
    } else {
    }
    return
  }
  func.func @transform_0(%arg0: i32, %arg1: i32) -> (i32, i32) {
    %c0_i32 = arith.constant 0 : i32
    return %arg0, %arg1 : i32, i32
  }
  func.func @transform_1(%arg0: i32, %arg1: i32) -> (i32, i32) {
    %c0_i32 = arith.constant 0 : i32
    %c0_i32_0 = arith.constant 0 : i32
    return %arg1, %c0_i32 : i32, i32
  }
  func.func @transform_2(%arg0: i32, %arg1: i32) -> (i32, i32) {
    %c0_i32 = arith.constant 0 : i32
    %c0_i32_0 = arith.constant 0 : i32
    %c0_i32_1 = arith.constant 0 : i32
    return %c0_i32, %c0_i32_0 : i32, i32
  }
  func.func @transform_3(%arg0: i32, %arg1: i32) -> (i32, i32) {
    %c0_i32 = arith.constant 0 : i32
    %c0_i32_0 = arith.constant 0 : i32
    return %arg0, %c0_i32 : i32, i32
  }
}

</mosaic_0001>

<llo_original>
// kernel: gcn_encoder_forward.6
$region0: #{gcn_encoder_forward.6}
  #allocation0 [shape = 'u32[]', space=smem, size = 0x4, offset = 0x4, fixed_abs, tag = 'smem constant byte address 0x4 - core index']
  #allocation1 [shape = 'u32[72,128]{1,0:T(1,128)}', space=vmem, size = 0x9000, scoped, tag = 'internal scratch']
  #allocation2 [shape = 'f32[16,128]{1,0:T(8,128)}', space=vmem, size = 0x2000, scoped, tag = 'scratch operand']
  %s0 = inlined_call_operand.vmem [shape: bf16[16,128], index: 0, kind: input, shape index: {}]
  %s1 = inlined_call_operand.vmem [shape: bf16[128,128], index: 1, kind: input, shape index: {}]
  %s2 = inlined_call_operand.vmem [shape: bf16[16,128], index: 2, kind: output, shape index: {}]
  %s3 = sld [smem:[#allocation0]]
  $region26: #{gcn_encoder_forward.6} parent=0
    _
  %s5 = ssub.s32 1, %s3
  %s6 = scalar_select 0, %s5, %s3
  // Predicated region
  $region2: #{gcn_encoder_forward.6} parent=0 // pred_check
    _
  $region3: #{gcn_encoder_forward.6} parent=0 // pred_check_branch
    %8 = sbr.rel (0) target = $region5
  $region4: #{gcn_encoder_forward.6} parent=0 // pred_region
    _
  $region5: #{gcn_encoder_forward.6} parent=0 // pred_fallthru
    _
  // Predicated region
  $region6: #{gcn_encoder_forward.6} parent=0 // pred_check
    _
  $region7: #{gcn_encoder_forward.6} parent=0 // pred_check_branch
    %10 = sbr.rel (0) target = $region9
  $region8: #{gcn_encoder_forward.6} parent=0 // pred_region
    _
  $region9: #{gcn_encoder_forward.6} parent=0 // pred_fallthru
    _
  %p11 = scmp.eq.s32.totalorder 0, 0
  // Predicated region
  $region10: #{gcn_encoder_forward.6} parent=0 // pred_check
    %p12 = pneg %p11
  $region11: #{gcn_encoder_forward.6} parent=0 // pred_check_branch
    %14 = sbr.rel (%p12) target = $region13
  $region12: #{gcn_encoder_forward.6} parent=0 // pred_region
    %15 = vst [vmem:[#allocation2] sm:$0xff] 0.0
    %16 = vst [vmem:[#allocation2 + $0x8] sm:$0xff] 0.0
  $region13: #{gcn_encoder_forward.6} parent=0 // pred_fallthru
    _
  %v17 = vld [vmem:[#allocation2] sm:$0xff]
  %v18 = vld [vmem:[#allocation2 + $0x8] sm:$0xff]
  %v19 = vld [vmem:[%s0] sm:$0xf]
  %v20 = vld [vmem:[%s0 + $0x4] sm:$0xf]
  %v21 = vld [vmem:[%s1] sm:$0xf]
  %v22 = vld [vmem:[%s1 + $0x4] sm:$0xf]
  %v23 = vld [vmem:[%s1 + $0x8] sm:$0xf]
  %v24 = vld [vmem:[%s1 + $0xc] sm:$0xf]
  %v25 = vld [vmem:[%s1 + $0x10] sm:$0xf]
  %v26 = vld [vmem:[%s1 + $0x14] sm:$0xf]
  %v27 = vld [vmem:[%s1 + $0x18] sm:$0xf]
  %v28 = vld [vmem:[%s1 + $0x1c] sm:$0xf]
  %v29 = vld [vmem:[%s1 + $0x20] sm:$0xf]
  %v30 = vld [vmem:[%s1 + $0x24] sm:$0xf]
  %v31 = vld [vmem:[%s1 + $0x28] sm:$0xf]
  %v32 = vld [vmem:[%s1 + $0x2c] sm:$0xf]
  %v33 = vld [vmem:[%s1 + $0x30] sm:$0xf]
  %v34 = vld [vmem:[%s1 + $0x34] sm:$0xf]
  %v35 = vld [vmem:[%s1 + $0x38] sm:$0xf]
  %v36 = vld [vmem:[%s1 + $0x3c] sm:$0xf]
  %v39 = vunpack.c.l.b16 %v19
  %v40 = vunpack.c.l.b16 %v20
  %v41 = vpack.c.b16 %v40, %v39
  %v59 = vunpack.c.l.b16 %v21
  %v60 = vunpack.c.l.b16 %v22
  %v61 = vunpack.c.l.b16 %v23
  %v62 = vunpack.c.l.b16 %v24
  %v63 = vunpack.c.l.b16 %v25
  %v64 = vunpack.c.l.b16 %v26
  %v65 = vunpack.c.l.b16 %v27
  %v66 = vunpack.c.l.b16 %v28
  %v67 = vunpack.c.l.b16 %v29
  %v68 = vunpack.c.l.b16 %v30
  %v69 = vunpack.c.l.b16 %v31
  %v70 = vunpack.c.l.b16 %v32
  %v71 = vunpack.c.l.b16 %v33
  %v72 = vunpack.c.l.b16 %v34
  %v73 = vunpack.c.l.b16 %v35
  %v74 = vunpack.c.l.b16 %v36
  %v75 = vpack.c.b16 %v60, %v59
  %v76 = vpack.c.b16 %v62, %v61
  %v77 = vpack.c.b16 %v64, %v63
  %v78 = vpack.c.b16 %v66, %v65
  %v79 = vpack.c.b16 %v68, %v67
  %v80 = vpack.c.b16 %v70, %v69
  %v81 = vpack.c.b16 %v72, %v71
  %v82 = vpack.c.b16 %v74, %v73
  %91 = vmatpush.bf16.msra.mxu0 %v82
  %92 = vmatpush.bf16.msra.mxu0 %v81
  %93 = vmatpush.bf16.msra.mxu0 %v80
  %94 = vmatpush.bf16.msra.mxu0 %v79
  %95 = vmatpush.bf16.msra.mxu0 %v78
  %96 = vmatpush.bf16.msra.mxu0 %v77
  %97 = vmatpush.bf16.msra.mxu0 %v76
  %98 = vmatpush.bf16.msra.mxu0 %v75
  %99 = vmatmul.bf16.gmra.mxu0 %v41
  %v100 = vpop.f32.mrf.mxu0
  %v101 = vadd.f32 0.0, %v100
  %v102 = vpop.f32.mrf.mxu0
  %v103 = vadd.f32 0.0, %v102
  %104 = vdwg.mxu0
  %v105 = vadd.f32 %v17, %v101
  %v106 = vadd.f32 %v18, %v103
  %107 = vst [vmem:[#allocation2] sm:$0xff] %v105
  %108 = vst [vmem:[#allocation2 + $0x8] sm:$0xff] %v106
  // Predicated region
  $region14: #{gcn_encoder_forward.6} parent=0 // pred_check
    %p109 = pneg %p11
  $region15: #{gcn_encoder_forward.6} parent=0 // pred_check_branch
    %111 = sbr.rel (%p109) target = $region17
  $region16: #{gcn_encoder_forward.6} parent=0 // pred_region
    %v112 = vld [vmem:[#allocation2] sm:$0xff]
    %v113 = vld [vmem:[#allocation2 + $0x8] sm:$0xff]
    %v114 = vpack.c.bf16 %v112, %v112
    %v115 = vpack.c.bf16 %v113, %v113
    %116 = vst [vmem:[%s2] sm:$0xf] %v114
    %117 = vst [vmem:[%s2 + $0x4] sm:$0xf] %v115
  $region17: #{gcn_encoder_forward.6} parent=0 // pred_fallthru
    _
  // Predicated region
  $region18: #{gcn_encoder_forward.6} parent=0 // pred_check
    _
  $region19: #{gcn_encoder_forward.6} parent=0 // pred_check_branch
    %119 = sbr.rel (0) target = $region21
  $region20: #{gcn_encoder_forward.6} parent=0 // pred_region
    _
  $region21: #{gcn_encoder_forward.6} parent=0 // pred_fallthru
    _
  // Predicated region
  $region22: #{gcn_encoder_forward.6} parent=0 // pred_check
    _
  $region23: #{gcn_encoder_forward.6} parent=0 // pred_check_branch
    %121 = sbr.rel (0) target = $region25
  $region24: #{gcn_encoder_forward.6} parent=0 // pred_region
    _
  $region25: #{gcn_encoder_forward.6} parent=0 // pred_fallthru
    _

// kernel: gcn_encoder_forward.5
$region0: #{gcn_encoder_forward.5}
  #allocation0 [shape = 'u32[]', space=smem, size = 0x4, offset = 0x4, fixed_abs, tag = 'smem constant byte address 0x4 - core index']
  #allocation1 [shape = 'u32[72,128]{1,0:T(1,128)}', space=vmem, size = 0x9000, scoped, tag = 'internal scratch']
  #allocation2 [shape = 'f32[16,128]{1,0:T(8,128)}', space=vmem, size = 0x2000, scoped, tag = 'scratch operand']
  %s0 = inlined_call_operand.vmem [shape: bf16[16,16], index: 0, kind: input, shape index: {}]
  %s1 = inlined_call_operand.vmem [shape: bf16[16,128], index: 1, kind: input, shape index: {}]
  %s2 = inlined_call_operand.vmem [shape: f32[1,128], index: 2, kind: input, shape index: {}]
  %s3 = inlined_call_operand.vmem [shape: bf16[16,128], index: 3, kind: output, shape index: {}]
  %s4 = sld [smem:[#allocation0]]
  $region30: #{gcn_encoder_forward.5} parent=0
    _
  %s6 = ssub.s32 1, %s4
  %s7 = scalar_select 0, %s6, %s4
  // Predicated region
  $region2: #{gcn_encoder_forward.5} parent=0 // pred_check
    _
  $region3: #{gcn_encoder_forward.5} parent=0 // pred_check_branch
    %9 = sbr.rel (0) target = $region5
  $region4: #{gcn_encoder_forward.5} parent=0 // pred_region
    _
  $region5: #{gcn_encoder_forward.5} parent=0 // pred_fallthru
    _
  // Predicated region
  $region6: #{gcn_encoder_forward.5} parent=0 // pred_check
    _
  $region7: #{gcn_encoder_forward.5} parent=0 // pred_check_branch
    %11 = sbr.rel (0) target = $region9
  $region8: #{gcn_encoder_forward.5} parent=0 // pred_region
    _
  $region9: #{gcn_encoder_forward.5} parent=0 // pred_fallthru
    _
  // Predicated region
  $region10: #{gcn_encoder_forward.5} parent=0 // pred_check
    _
  $region11: #{gcn_encoder_forward.5} parent=0 // pred_check_branch
    %13 = sbr.rel (0) target = $region13
  $region12: #{gcn_encoder_forward.5} parent=0 // pred_region
    _
  $region13: #{gcn_encoder_forward.5} parent=0 // pred_fallthru
    _
  %p15 = scmp.eq.s32.totalorder 0, 0
  // Predicated region
  $region14: #{gcn_encoder_forward.5} parent=0 // pred_check
    %p16 = pneg %p15
  $region15: #{gcn_encoder_forward.5} parent=0 // pred_check_branch
    %18 = sbr.rel (%p16) target = $region17
  $region16: #{gcn_encoder_forward.5} parent=0 // pred_region
    %19 = vst [vmem:[#allocation2] sm:$0xff] 0.0
    %20 = vst [vmem:[#allocation2 + $0x8] sm:$0xff] 0.0
  $region17: #{gcn_encoder_forward.5} parent=0 // pred_fallthru
    _
  %v21 = vld [vmem:[#allocation2] sm:$0xff]
  %v22 = vld [vmem:[#allocation2 + $0x8] sm:$0xff]
  %v23 = vld [vmem:[%s0] sm:$0xf]
  %v24 = vld [vmem:[%s0 + $0x4] sm:$0xf]
  %v25 = vld [vmem:[%s1] sm:$0xf]
  %v26 = vld [vmem:[%s1 + $0x4] sm:$0xf]
  %v29 = vunpack.c.l.b16 %v23
  %v30 = vunpack.c.l.b16 %v24
  %v31 = vpack.c.b16 %v30, %v29
  %v34 = vunpack.c.l.b16 %v25
  %v35 = vunpack.c.l.b16 %v26
  %v36 = vpack.c.b16 %v35, %v34
  %vm38 = vcmask 130048
  %v40 = vsel %vm38, %v31, 0
  %42 = vmatpush.bf16.msra.mxu0 0
  %43 = vmatpush.bf16.msra.mxu0 0
  %44 = vmatpush.bf16.msra.mxu0 0
  %45 = vmatpush.bf16.msra.mxu0 0
  %46 = vmatpush.bf16.msra.mxu0 0
  %47 = vmatpush.bf16.msra.mxu0 0
  %48 = vmatpush.bf16.msra.mxu0 0
  %49 = vmatpush.bf16.msra.mxu0 %v36
  %50 = vmatmul.bf16.gmra.mxu0 %v40
  %v51 = vpop.f32.mrf.mxu0
  %v52 = vadd.f32 0.0, %v51
  %v53 = vpop.f32.mrf.mxu0
  %v54 = vadd.f32 0.0, %v53
  %55 = vdwg.mxu0
  %v56 = vadd.f32 %v21, %v52
  %v57 = vadd.f32 %v22, %v54
  %58 = vst [vmem:[#allocation2] sm:$0xff] %v56
  %59 = vst [vmem:[#allocation2 + $0x8] sm:$0xff] %v57
  // Predicated region
  $region18: #{gcn_encoder_forward.5} parent=0 // pred_check
    %p60 = pneg %p15
  $region19: #{gcn_encoder_forward.5} parent=0 // pred_check_branch
    %62 = sbr.rel (%p60) target = $region21
  $region20: #{gcn_encoder_forward.5} parent=0 // pred_region
    %v63 = vld [vmem:[#allocation2] sm:$0xff]
    %v64 = vld [vmem:[#allocation2 + $0x8] sm:$0xff]
    %v65 = vld [vmem:[%s2] sm:$0x1]
    %v67 = vperm.slane %v65, 0
    %v69 = vadd.f32 %v63, %v67
    %v70 = vadd.f32 %v64, %v67
    %v71 = vmax.f32 %v69, 0.0
    %v72 = vmax.f32 %v70, 0.0
    %v73 = vpack.c.bf16 %v71, %v71
    %v74 = vpack.c.bf16 %v72, %v72
    %75 = vst [vmem:[%s3] sm:$0xf] %v73
    %76 = vst [vmem:[%s3 + $0x4] sm:$0xf] %v74
  $region21: #{gcn_encoder_forward.5} parent=0 // pred_fallthru
    _
  // Predicated region
  $region22: #{gcn_encoder_forward.5} parent=0 // pred_check
    _
  $region23: #{gcn_encoder_forward.5} parent=0 // pred_check_branch
    %78 = sbr.rel (0) target = $region25
  $region24: #{gcn_encoder_forward.5} parent=0 // pred_region
    _
  $region25: #{gcn_encoder_forward.5} parent=0 // pred_fallthru
    _
  // Predicated region
  $region26: #{gcn_encoder_forward.5} parent=0 // pred_check
    _
  $region27: #{gcn_encoder_forward.5} parent=0 // pred_check_branch
    %80 = sbr.rel (0) target = $region29
  $region28: #{gcn_encoder_forward.5} parent=0 // pred_region
    _
  $region29: #{gcn_encoder_forward.5} parent=0 // pred_fallthru
    _

// kernel: gcn_encoder_forward.4
$region0: #{gcn_encoder_forward.4}
  #allocation0 [shape = 'u32[]', space=smem, size = 0x4, offset = 0x4, fixed_abs, tag = 'smem constant byte address 0x4 - core index']
  #allocation1 [shape = 'u32[72,128]{1,0:T(1,128)}', space=vmem, size = 0x9000, scoped, tag = 'internal scratch']
  #allocation2 [shape = 'f32[16,128]{1,0:T(8,128)}', space=vmem, size = 0x2000, scoped, tag = 'scratch operand']
  %s0 = inlined_call_operand.vmem [shape: bf16[16,16], index: 0, kind: input, shape index: {}]
  %s1 = inlined_call_operand.vmem [shape: bf16[16,128], index: 1, kind: input, shape index: {}]
  %s2 = inlined_call_operand.vmem [shape: bf16[16,128], index: 2, kind: output, shape index: {}]
  %s3 = sld [smem:[#allocation0]]
  $region26: #{gcn_encoder_forward.4} parent=0
    _
  %s5 = ssub.s32 1, %s3
  %s6 = scalar_select 0, %s5, %s3
  // Predicated region
  $region2: #{gcn_encoder_forward.4} parent=0 // pred_check
    _
  $region3: #{gcn_encoder_forward.4} parent=0 // pred_check_branch
    %8 = sbr.rel (0) target = $region5
  $region4: #{gcn_encoder_forward.4} parent=0 // pred_region
    _
  $region5: #{gcn_encoder_forward.4} parent=0 // pred_fallthru
    _
  // Predicated region
  $region6: #{gcn_encoder_forward.4} parent=0 // pred_check
    _
  $region7: #{gcn_encoder_forward.4} parent=0 // pred_check_branch
    %10 = sbr.rel (0) target = $region9
  $region8: #{gcn_encoder_forward.4} parent=0 // pred_region
    _
  $region9: #{gcn_encoder_forward.4} parent=0 // pred_fallthru
    _
  %p12 = scmp.eq.s32.totalorder 0, 0
  // Predicated region
  $region10: #{gcn_encoder_forward.4} parent=0 // pred_check
    %p13 = pneg %p12
  $region11: #{gcn_encoder_forward.4} parent=0 // pred_check_branch
    %15 = sbr.rel (%p13) target = $region13
  $region12: #{gcn_encoder_forward.4} parent=0 // pred_region
    %16 = vst [vmem:[#allocation2] sm:$0xff] 0.0
    %17 = vst [vmem:[#allocation2 + $0x8] sm:$0xff] 0.0
  $region13: #{gcn_encoder_forward.4} parent=0 // pred_fallthru
    _
  %v18 = vld [vmem:[#allocation2] sm:$0xff]
  %v19 = vld [vmem:[#allocation2 + $0x8] sm:$0xff]
  %v20 = vld [vmem:[%s0] sm:$0xf]
  %v21 = vld [vmem:[%s0 + $0x4] sm:$0xf]
  %v22 = vld [vmem:[%s1] sm:$0xf]
  %v23 = vld [vmem:[%s1 + $0x4] sm:$0xf]
  %v26 = vunpack.c.l.b16 %v20
  %v27 = vunpack.c.l.b16 %v21
  %v28 = vpack.c.b16 %v27, %v26
  %v31 = vunpack.c.l.b16 %v22
  %v32 = vunpack.c.l.b16 %v23
  %v33 = vpack.c.b16 %v32, %v31
  %vm35 = vcmask 130048
  %v37 = vsel %vm35, %v28, 0
  %39 = vmatpush.bf16.msra.mxu0 0
  %40 = vmatpush.bf16.msra.mxu0 0
  %41 = vmatpush.bf16.msra.mxu0 0
  %42 = vmatpush.bf16.msra.mxu0 0
  %43 = vmatpush.bf16.msra.mxu0 0
  %44 = vmatpush.bf16.msra.mxu0 0
  %45 = vmatpush.bf16.msra.mxu0 0
  %46 = vmatpush.bf16.msra.mxu0 %v33
  %47 = vmatmul.bf16.gmra.mxu0 %v37
  %v48 = vpop.f32.mrf.mxu0
  %v49 = vadd.f32 0.0, %v48
  %v50 = vpop.f32.mrf.mxu0
  %v51 = vadd.f32 0.0, %v50
  %52 = vdwg.mxu0
  %v53 = vadd.f32 %v18, %v49
  %v54 = vadd.f32 %v19, %v51
  %55 = vst [vmem:[#allocation2] sm:$0xff] %v53
  %56 = vst [vmem:[#allocation2 + $0x8] sm:$0xff] %v54
  // Predicated region
  $region14: #{gcn_encoder_forward.4} parent=0 // pred_check
    %p57 = pneg %p12
  $region15: #{gcn_encoder_forward.4} parent=0 // pred_check_branch
    %59 = sbr.rel (%p57) target = $region17
  $region16: #{gcn_encoder_forward.4} parent=0 // pred_region
    %v60 = vld [vmem:[#allocation2] sm:$0xff]
    %v61 = vld [vmem:[#allocation2 + $0x8] sm:$0xff]
    %v62 = vpack.c.bf16 %v60, %v60
    %v63 = vpack.c.bf16 %v61, %v61
    %64 = vst [vmem:[%s2] sm:$0xf] %v62
    %65 = vst [vmem:[%s2 + $0x4] sm:$0xf] %v63
  $region17: #{gcn_encoder_forward.4} parent=0 // pred_fallthru
    _
  // Predicated region
  $region18: #{gcn_encoder_forward.4} parent=0 // pred_check
    _
  $region19: #{gcn_encoder_forward.4} parent=0 // pred_check_branch
    %67 = sbr.rel (0) target = $region21
  $region20: #{gcn_encoder_forward.4} parent=0 // pred_region
    _
  $region21: #{gcn_encoder_forward.4} parent=0 // pred_fallthru
    _
  // Predicated region
  $region22: #{gcn_encoder_forward.4} parent=0 // pred_check
    _
  $region23: #{gcn_encoder_forward.4} parent=0 // pred_check_branch
    %69 = sbr.rel (0) target = $region25
  $region24: #{gcn_encoder_forward.4} parent=0 // pred_region
    _
  $region25: #{gcn_encoder_forward.4} parent=0 // pred_fallthru
    _

// kernel: gcn_encoder_forward.7
$region0: #{gcn_encoder_forward.7}
  #allocation0 [shape = 'u32[]', space=smem, size = 0x4, offset = 0x4, fixed_abs, tag = 'smem constant byte address 0x4 - core index']
  #allocation1 [shape = 'u32[72,128]{1,0:T(1,128)}', space=vmem, size = 0x9000, scoped, tag = 'internal scratch']
  %s0 = inlined_call_operand.vmem [shape: bf16[16,16], index: 0, kind: input, shape index: {}]
  %s1 = inlined_call_operand.vmem [shape: bf16[16,128], index: 1, kind: input, shape index: {}]
  %s2 = inlined_call_operand.vmem [shape: f32[1,128], index: 2, kind: input, shape index: {}]
  %s3 = inlined_call_operand.vmem [shape: f32[16,128], index: 3, kind: output, shape index: {}]
  %s4 = sld [smem:[#allocation0]]
  $region30: #{gcn_encoder_forward.7} parent=0
    _
  %s6 = ssub.s32 1, %s4
  %s7 = scalar_select 0, %s6, %s4
  // Predicated region
  $region2: #{gcn_encoder_forward.7} parent=0 // pred_check
    _
  $region3: #{gcn_encoder_forward.7} parent=0 // pred_check_branch
    %9 = sbr.rel (0) target = $region5
  $region4: #{gcn_encoder_forward.7} parent=0 // pred_region
    _
  $region5: #{gcn_encoder_forward.7} parent=0 // pred_fallthru
    _
  // Predicated region
  $region6: #{gcn_encoder_forward.7} parent=0 // pred_check
    _
  $region7: #{gcn_encoder_forward.7} parent=0 // pred_check_branch
    %11 = sbr.rel (0) target = $region9
  $region8: #{gcn_encoder_forward.7} parent=0 // pred_region
    _
  $region9: #{gcn_encoder_forward.7} parent=0 // pred_fallthru
    _
  // Predicated region
  $region10: #{gcn_encoder_forward.7} parent=0 // pred_check
    _
  $region11: #{gcn_encoder_forward.7} parent=0 // pred_check_branch
    %13 = sbr.rel (0) target = $region13
  $region12: #{gcn_encoder_forward.7} parent=0 // pred_region
    _
  $region13: #{gcn_encoder_forward.7} parent=0 // pred_fallthru
    _
  %p15 = scmp.eq.s32.totalorder 0, 0
  // Predicated region
  $region14: #{gcn_encoder_forward.7} parent=0 // pred_check
    %p16 = pneg %p15
  $region15: #{gcn_encoder_forward.7} parent=0 // pred_check_branch
    %18 = sbr.rel (%p16) target = $region17
  $region16: #{gcn_encoder_forward.7} parent=0 // pred_region
    %19 = vst [vmem:[%s3] sm:$0xff] 0.0
    %20 = vst [vmem:[%s3 + $0x8] sm:$0xff] 0.0
  $region17: #{gcn_encoder_forward.7} parent=0 // pred_fallthru
    _
  %v21 = vld [vmem:[%s3] sm:$0xff]
  %v22 = vld [vmem:[%s3 + $0x8] sm:$0xff]
  %v23 = vld [vmem:[%s0] sm:$0xf]
  %v24 = vld [vmem:[%s0 + $0x4] sm:$0xf]
  %v25 = vld [vmem:[%s1] sm:$0xf]
  %v26 = vld [vmem:[%s1 + $0x4] sm:$0xf]
  %v29 = vunpack.c.l.b16 %v23
  %v30 = vunpack.c.l.b16 %v24
  %v31 = vpack.c.b16 %v30, %v29
  %v34 = vunpack.c.l.b16 %v25
  %v35 = vunpack.c.l.b16 %v26
  %v36 = vpack.c.b16 %v35, %v34
  %vm38 = vcmask 130048
  %v40 = vsel %vm38, %v31, 0
  %42 = vmatpush.bf16.msra.mxu0 0
  %43 = vmatpush.bf16.msra.mxu0 0
  %44 = vmatpush.bf16.msra.mxu0 0
  %45 = vmatpush.bf16.msra.mxu0 0
  %46 = vmatpush.bf16.msra.mxu0 0
  %47 = vmatpush.bf16.msra.mxu0 0
  %48 = vmatpush.bf16.msra.mxu0 0
  %49 = vmatpush.bf16.msra.mxu0 %v36
  %50 = vmatmul.bf16.gmra.mxu0 %v40
  %v51 = vpop.f32.mrf.mxu0
  %v52 = vadd.f32 0.0, %v51
  %v53 = vpop.f32.mrf.mxu0
  %v54 = vadd.f32 0.0, %v53
  %55 = vdwg.mxu0
  %v56 = vadd.f32 %v21, %v52
  %v57 = vadd.f32 %v22, %v54
  %58 = vst [vmem:[%s3] sm:$0xff] %v56
  %59 = vst [vmem:[%s3 + $0x8] sm:$0xff] %v57
  // Predicated region
  $region18: #{gcn_encoder_forward.7} parent=0 // pred_check
    %p60 = pneg %p15
  $region19: #{gcn_encoder_forward.7} parent=0 // pred_check_branch
    %62 = sbr.rel (%p60) target = $region21
  $region20: #{gcn_encoder_forward.7} parent=0 // pred_region
    %v63 = vld [vmem:[%s3] sm:$0xff]
    %v64 = vld [vmem:[%s3 + $0x8] sm:$0xff]
    %v65 = vld [vmem:[%s2] sm:$0x1]
    %v67 = vperm.slane %v65, 0
    %v69 = vadd.f32 %v63, %v67
    %v70 = vadd.f32 %v64, %v67
    %71 = vst [vmem:[%s3] sm:$0xff] %v69
    %72 = vst [vmem:[%s3 + $0x8] sm:$0xff] %v70
  $region21: #{gcn_encoder_forward.7} parent=0 // pred_fallthru
    _
  // Predicated region
  $region22: #{gcn_encoder_forward.7} parent=0 // pred_check
    _
  $region23: #{gcn_encoder_forward.7} parent=0 // pred_check_branch
    %74 = sbr.rel (0) target = $region25
  $region24: #{gcn_encoder_forward.7} parent=0 // pred_region
    _
  $region25: #{gcn_encoder_forward.7} parent=0 // pred_fallthru
    _
  // Predicated region
  $region26: #{gcn_encoder_forward.7} parent=0 // pred_check
    _
  $region27: #{gcn_encoder_forward.7} parent=0 // pred_check_branch
    %76 = sbr.rel (0) target = $region29
  $region28: #{gcn_encoder_forward.7} parent=0 // pred_region
    _
  $region29: #{gcn_encoder_forward.7} parent=0 // pred_fallthru
    _

</llo_original>
